<compile_context>
chip_gen: v7x
topology: tpu7x:2x2x1
jax: 0.10.0
libtpu: 0.0.40
codegen_flags: <defaults>
</compile_context>

<pallas_src>
import jax
import jax.numpy as jnp
from jax.experimental import pallas as pl
from jax.experimental.pallas import tpu as pltpu


def _dma_snapshot_kernel(x_hbm, o_hbm, sem):
    # Single-descriptor HBM -> HBM copy; the DMA engine streams at line rate.
    cp = pltpu.make_async_copy(x_hbm, o_hbm, sem)
    cp.start()
    cp.wait()


def _pallas_snapshot(x):
    """Materialize a snapshot of `x` with one HBM->HBM DMA (no VMEM staging)."""
    x = jnp.asarray(x)
    if x.size == 0:
        # Nothing to buffer; skip the kernel launch entirely.
        return x

    nbytes = x.size * x.dtype.itemsize
    return pl.pallas_call(
        _dma_snapshot_kernel,
        out_shape=jax.ShapeDtypeStruct(x.shape, x.dtype),
        in_specs=[pl.BlockSpec(memory_space=pl.ANY)],   # raw HBM ref, no auto-DMA
        out_specs=pl.BlockSpec(memory_space=pl.ANY),    # raw HBM ref
        scratch_shapes=[pltpu.SemaphoreType.DMA(())],
        cost_estimate=pl.CostEstimate(
            flops=0, transcendentals=0, bytes_accessed=2 * nbytes),
    )(x)


class DelayedPass:
    """Functional/stateful equivalent of the torch DelayedPass module.

    forward(x): returns the previously buffered tensor (None on the first
    call) and buffers the current input.  The persistent `keep` state lives
    in this Python wrapper because JAX/Pallas is functional.

    materialize=True  -> buffer via the Pallas HBM->HBM DMA snapshot kernel.
    materialize=False -> zero-copy: store the (immutable) input reference,
                         which is exactly the torch buffer semantics with no
                         HBM traffic at all.
    """

    def __init__(self, materialize=True):
        self.keep = None            # mirrors register_buffer('keep', None)
        self._materialize = materialize

    def __call__(self, x):
        rv = self.keep
        if x is None or not self._materialize:
            self.keep = x
        else:
            self.keep = _pallas_snapshot(x)
        return rv

    forward = __call__


if __name__ == "__main__":
    key = jax.random.PRNGKey(0)
    k1, k2, k3, k4 = jax.random.split(key, 4)

    B, C, H, W = 2, 4, 16, 16
    x1 = jax.random.normal(k1, (B, C, H, W), dtype=jnp.float32)
    x2 = jax.random.normal(k2, (B, C, H, W), dtype=jnp.float32)
    x3 = jax.random.normal(k3, (B, C, H, W), dtype=jnp.float32)

    # --- Pallas-kernel (materializing) path --------------------------------
    dp = DelayedPass()

    out1 = dp(x1)
    assert out1 is None, "first call must return the initial (None) buffer"
    jax.block_until_ready(dp.keep)

    out2 = jax.block_until_ready(dp(x2))
    assert jnp.array_equal(out2, x1), "second call must return the first input"

    out3 = jax.block_until_ready(dp(x3))
    assert jnp.array_equal(out3, x2), "third call must return the second input"

    # Odd, non-128-multiple shape goes through the same DMA path (no VMEM
    # staging, no masked stores).
    odd = jax.random.normal(k4, (3, 5, 7), dtype=jnp.float32)
    dp_odd = DelayedPass()
    assert dp_odd(odd) is None
    out_odd = jax.block_until_ready(dp_odd(jnp.zeros((3, 5, 7), jnp.float32)))
    assert jnp.array_equal(out_odd, odd)

    # Empty input: handled without a kernel launch.
    dp_empty = DelayedPass()
    assert dp_empty(jnp.zeros((0, 4), jnp.float32)) is None
    out_empty = dp_empty(jnp.zeros((0, 4), jnp.float32))
    assert out_empty.shape == (0, 4)

    # --- Zero-copy (reference-semantics) path ------------------------------
    dp_ref = DelayedPass(materialize=False)
    assert dp_ref(x1) is None
    assert dp_ref(x2) is x1, "zero-copy mode must return the exact same array object"

    print("KERNEL_OK")
</pallas_src>

<mosaic_0001>
module attributes {stable_mosaic.version = 11 : i64} {
  func.func @_dma_snapshot_kernel(%arg0: memref<2x4x16x16xf32, #tpu.memory_space<any>>, %arg1: memref<2x4x16x16xf32, #tpu.memory_space<any>>, %arg2: memref<!tpu.dma_semaphore, #tpu.memory_space<semaphore_mem>>) attributes {dimension_semantics = [], scalar_prefetch = 0 : i64, scratch_operands = 1 : i64, tpu.core_type = #tpu.core_type<tc>} {
    tpu.enqueue_dma source(%arg0 : memref<2x4x16x16xf32, #tpu.memory_space<any>>) target(%arg1 : memref<2x4x16x16xf32, #tpu.memory_space<any>>) target_semaphore(%arg2 : memref<!tpu.dma_semaphore, #tpu.memory_space<semaphore_mem>>)
    tpu.wait_dma2 semaphore(%arg2 : memref<!tpu.dma_semaphore, #tpu.memory_space<semaphore_mem>>) src(%arg0 : memref<2x4x16x16xf32, #tpu.memory_space<any>>) dst(%arg1 : memref<2x4x16x16xf32, #tpu.memory_space<any>>)
    return
  }
}

</mosaic_0001>

<llo_original>
// kernel: tpu_custom_call.1
$region0: #{tpu_custom_call.1}
  #allocation0 [shape = 'u32[]', space=smem, size = 0x4, offset = 0x4, fixed_abs, tag = 'smem constant byte address 0x4 - core index']
  #allocation1 [shape = 'u32[144,128]{1,0:T(1,128)}', space=vmem, size = 0x12000, scoped, tag = 'internal scratch']
  #allocation2 [shape = 's32[1]{0}', space=sflag, size = 0x4, scoped, tag = 'scratch operand']
  #allocation3 [shape = 's32[]', space=sflag, size = 0x4, offset = 0, fixed_abs, tag = 'sflag constant byte address 0x0 - dummy sync flag']
  #allocation4 [shape = 'u32[0]{0}', space=smem, size = 0, offset = 0, fixed_abs, tag = 'smem constant byte address 0x0 - null']
  %s0 = inlined_call_operand.hbm [shape: f32[2,4,16,16], index: 0, kind: input, shape index: {}]
  %s1 = inlined_call_operand.hbm [shape: f32[2,4,16,16], index: 1, kind: output, shape index: {}]
  %s2 = sld [smem:[#allocation0]]
  $region2: #{tpu_custom_call.1} parent=0
    _
  %s4 = ssub.s32 1, %s2
  %s5 = scalar_select 0, %s4, %s2
  %s7 = sshll.u32 1, 14
  %s8 = sxor.u32 4294967295, %s7
  %s11 = sshll.u32 3, 24
  %s12 = sxor.u32 4294967295, %s11
  %s13 = sand.u32 0, %s12
  %s15 = sor.u32 %s13, 0
  %18 = dma.general %s0, 2048, %s1, [#allocation2], [#allocation3], [#allocation4], %s15, 0
  %s19 = smul.u32 2, 4
  %s20 = smul.u32 %s19, 16
  %s21 = smul.u32 %s20, 1
  %s22 = sshll.u32 %s21, 4
  %23 = dma.done [#allocation2], %s22
  %24 = vsyncmov [#allocation2]
  %s25 = vpop.sfrf %24
  %p26 = scmp.eq.s32.totalorder %s25, 0
  %p27 = pneg %p26
  %29 = shalt.err (%p27)

</llo_original>
